<compile_context>
chip_gen: v7x
topology: tpu7x:2x2x1
jax: 0.10.0
libtpu: 0.0.40
codegen_flags: <defaults>
</compile_context>

<pallas_src>
import math
from itertools import combinations

import jax
import jax.numpy as jnp
from jax.experimental import pallas as pl
from jax.experimental.pallas import tpu as pltpu


# ----------------------------------------------------------------------------- #
# Host-side helpers: VMEM-aware tile sizing
# ----------------------------------------------------------------------------- #
def _cdiv(a, b):
    return -(-a // b)


def _round_up(x, m):
    return ((x + m - 1) // m) * m


def _tpu_vmem_capacity_bytes():
    """Physical per-TensorCore VMEM (128 MiB on v5e/v6e, 64 MiB on v7x)."""
    try:
        cap = int(pltpu.get_tpu_info().vmem_capacity_bytes)
        if cap > 0:
            return cap
    except Exception:
        pass
    return 64 * 1024 * 1024  # conservative (v7x-sized) fallback


# Rough count of live (tm, width)-sized f32 buffers per grid step:
#   double-buffered x-in (2) + double-buffered out (2) + f32 temporaries
#   (x, x*x, ssq, xn, y and y*y at 2x width, result) ~ 8.
_LIVE_ROW_BUFFERS = 12


def _choose_row_tile(n_rows, width, *, elem_bytes=4, weights_bytes=0, vmem_cap=None):
    """Largest row tile (in rows) whose working set fits the VMEM budget.

    Sized by bytes, not rows (per-grid-step overhead ~0.35 us; >=0.5-1 MiB tiles
    are needed to approach the HBM roofline), capped at 8192 rows, rounded to the
    sublane multiple, and clamped so the grid keeps >= 2 steps when possible.
    """
    if vmem_cap is None:
        vmem_cap = _tpu_vmem_capacity_bytes()
    sub = 16 if elem_bytes == 2 else 8
    usable = int(vmem_cap * 0.75) - weights_bytes
    usable = max(usable, 4 * 1024 * 1024)
    tm = usable // max(1, _LIVE_ROW_BUFFERS * width * 4)
    tm = max(sub, min(int(tm), 8192))
    tm = (tm // sub) * sub
    if n_rows > sub:  # keep >= 2 grid steps so both TensorCores get work (v7x)
        tm = min(tm, _round_up(_cdiv(n_rows, 2), sub))
    tm = min(tm, _round_up(n_rows, sub))
    return int(max(tm, sub))


def _vmem_limit_bytes(tm, width, weights_bytes, vmem_cap):
    """Scoped VMEM request: >= actual estimate with 2x headroom, but always
    leaving >=15% of physical VMEM for compiler scratch (matters on v7x)."""
    est = _LIVE_ROW_BUFFERS * tm * width * 4 + weights_bytes
    lim = max(2 * est, 32 * 1024 * 1024)
    return int(min(lim, int(vmem_cap * 0.85)))


# ----------------------------------------------------------------------------- #
# Parameter-side matrix construction (plain JAX; tiny sequential matrix chain)
# ----------------------------------------------------------------------------- #
# TODO(synk): the plane-rotation chain (comb(D,2) sequential D x D matmuls) is
# parameter-only, tiny and inherently sequential, so it is built with lax.scan in
# plain JAX; it has no useful Pallas equivalent.
def _plane_rotation_matrix(ndim, rots):
    """Equivalent of plane_rotations.get_mat() (real-valued)."""
    pairs = list(combinations(range(ndim), 2))
    ii = jnp.array([p[0] for p in pairs], dtype=jnp.int32)
    jj = jnp.array([p[1] for p in pairs], dtype=jnp.int32)
    c = jnp.cos(rots).astype(jnp.float32)
    s = jnp.sin(rots).astype(jnp.float32)
    k = jnp.arange(len(pairs))

    eye = jnp.eye(ndim, dtype=jnp.float32)
    mats = jnp.broadcast_to(eye, (len(pairs), ndim, ndim))
    mats = mats.at[k, ii, ii].set(c)
    mats = mats.at[k, jj, jj].set(c)
    mats = mats.at[k, ii, jj].set(-s)
    mats = mats.at[k, jj, ii].set(s)

    def step(acc, m):
        return m @ acc, None  # mat = plane_rot @ mat, in pair order

    mat, _ = jax.lax.scan(step, eye, mats)
    return mat.T  # torch code returns mat.T


def _qlayer_mat_parts(ndim, rots1, phases, rots2):
    """Real / imaginary parts of qlayer.get_mat() = R1 @ diag(e^{i phi}) @ R2."""
    r1 = _plane_rotation_matrix(ndim, rots1)   # rot1.get_mat()  (real)
    r2 = _plane_rotation_matrix(ndim, rots2)   # rot2.get_mat()  (real)
    cosp = jnp.cos(phases).astype(jnp.float32)
    sinp = jnp.sin(phases).astype(jnp.float32)
    mr = (r1 * cosp[None, :]) @ r2             # Re(M)
    mi = (r1 * sinp[None, :]) @ r2             # Im(M)
    return mr, mi


# ----------------------------------------------------------------------------- #
# Fused qlayer forward kernel: normalize rows -> complex matmul -> |y|^2
# (everything lane-dense, all reductions/broadcasts routed through the MXU)
# ----------------------------------------------------------------------------- #
def _qlayer_fused_kernel(x_ref, seg_ref, w_ref, fold_ref, o_ref):
    x = x_ref[...].astype(jnp.float32)
    # Per-segment sum of squares, broadcast back to every lane of its segment:
    # (x*x) @ blockdiag(ones(D,D)).  MXU work (free in a mem-bound kernel),
    # avoids cross-lane reductions / reshapes.
    ssq = jnp.dot(x * x, seg_ref[...], preferred_element_type=jnp.float32)
    xn = x * jax.lax.rsqrt(ssq)                     # row L2 normalize (EUP + VPU)
    # Fused complex matmul: W = [blockdiag(Re M) | blockdiag(Im M)]  ->  one MXU
    # pass produces Re(y) (first half of lanes) and Im(y) (second half).
    y = jnp.dot(xn, w_ref[...], preferred_element_type=jnp.float32)
    # |y|^2 = Re^2 + Im^2: fold the two halves with the stacked identity [I; I]
    # on the MXU instead of slicing lanes in-register.
    o_ref[...] = jnp.dot(y * y, fold_ref[...],
                         preferred_element_type=jnp.float32).astype(o_ref.dtype)


def qlayer_forward(x, rots1, phases, rots2, *, tm=None, as_complex=True):
    """Pallas-backed qlayer.forward(x) for real x of shape (N, D).

    Returns complex64 (matching torch.cfloat): |vnorm(x) @ M|^2 with zero imag
    part.  Set as_complex=False to skip the (purely memory-bound) f32->complex64
    cast if downstream only needs the real part.
    NOTE: rows with all-zero norm produce inf/NaN, mirroring torch's behavior.
    """
    n, d = x.shape
    mr, mi = _qlayer_mat_parts(d, rots1, phases, rots2)

    # ---- lane packing: fold k rows into one packed row so the lane (last)
    # dimension is 128-dense for small D.  Free, contiguous reshape. ---------- #
    k = 1
    if d < 128 and 128 % d == 0:
        k = 128 // d
        while k > 1 and n % k != 0:
            k //= 2
    w = k * d
    np_rows = n // k
    xp = x.reshape(np_rows, w) if k > 1 else x

    # ---- parameter-side operand build (tiny, plain JAX) --------------------- #
    eye_k = jnp.eye(k, dtype=jnp.float32)
    wmat = jnp.concatenate([jnp.kron(eye_k, mr), jnp.kron(eye_k, mi)], axis=1)   # (w, 2w)
    seg = jnp.kron(eye_k, jnp.ones((d, d), jnp.float32))                         # (w, w)
    eye_w = jnp.eye(w, dtype=jnp.float32)
    fold = jnp.concatenate([eye_w, eye_w], axis=0)                               # (2w, w)

    # Constant-index weight blocks never re-DMA; account their double-buffer
    # VMEM (2 x 5*w^2*4 B) in the budget instead of using pl.Buffered(1).
    weights_bytes = 2 * 5 * w * w * 4
    vmem_cap = _tpu_vmem_capacity_bytes()
    if tm is None:
        tm = _choose_row_tile(np_rows, w, elem_bytes=x.dtype.itemsize,
                              weights_bytes=weights_bytes, vmem_cap=vmem_cap)
    grid = (_cdiv(np_rows, tm),)

    out = pl.pallas_call(
        _qlayer_fused_kernel,
        out_shape=jax.ShapeDtypeStruct((np_rows, w), jnp.float32),
        grid_spec=pl.GridSpec(
            grid=grid,
            in_specs=[
                pl.BlockSpec((tm, w), lambda i: (i, 0)),      # packed x row tile
                pl.BlockSpec((w, w), lambda i: (0, 0)),       # segment sum/broadcast
                pl.BlockSpec((w, 2 * w), lambda i: (0, 0)),   # [Re(M)|Im(M)] blockdiag
                pl.BlockSpec((2 * w, w), lambda i: (0, 0)),   # [I; I] fold matrix
            ],
            out_specs=pl.BlockSpec((tm, w), lambda i: (i, 0)),
        ),
        compiler_params=pltpu.CompilerParams(
            # TODO(synk): switch to pltpu.CORE_PARALLEL when targeting v7x only;
            # plain "parallel" is safe across v5e/v6e/v7x.
            dimension_semantics=("parallel",),
            vmem_limit_bytes=_vmem_limit_bytes(tm, w, weights_bytes, vmem_cap),
        ),
    )(xp, seg, wmat, fold)

    out = out.reshape(n, d)
    if not as_complex:
        # The complex64 cast is a separate XLA pass (~1.5x the fused kernel's HBM
        # traffic); skip it when the caller only needs the (zero-imag) real part.
        return out
    return out.astype(jnp.complex64)  # measure(): (|y|^2).type(torch.cfloat)


# ----------------------------------------------------------------------------- #
# Standalone vector_norm kernel (row-wise L2 normalization)
# ----------------------------------------------------------------------------- #
def _row_l2_normalize_kernel(x_ref, o_ref):
    x = x_ref[...].astype(jnp.float32)
    inv_norm = jax.lax.rsqrt(jnp.sum(x * x, axis=-1, keepdims=True))
    o_ref[...] = (x * inv_norm).astype(o_ref.dtype)


def vector_norm(x, *, tm=None):
    """(x.T / ||x||_row).T for a 2D array x (the `vector_norm` sub-module).

    NOTE: qlayer_forward fuses the normalization into its single kernel; calling
    this followed by a separate matmul/measure pass doubles HBM traffic.
    """
    n, d = x.shape
    vmem_cap = _tpu_vmem_capacity_bytes()
    if tm is None:
        tm = _choose_row_tile(n, d, elem_bytes=x.dtype.itemsize,
                              weights_bytes=0, vmem_cap=vmem_cap)
    grid = (_cdiv(n, tm),)
    return pl.pallas_call(
        _row_l2_normalize_kernel,
        out_shape=jax.ShapeDtypeStruct((n, d), x.dtype),
        grid_spec=pl.GridSpec(
            grid=grid,
            in_specs=[pl.BlockSpec((tm, d), lambda i: (i, 0))],
            out_specs=pl.BlockSpec((tm, d), lambda i: (i, 0)),
        ),
        compiler_params=pltpu.CompilerParams(
            dimension_semantics=("parallel",),
            vmem_limit_bytes=_vmem_limit_bytes(tm, d, 0, vmem_cap),
        ),
    )(x)


# ----------------------------------------------------------------------------- #
# Self-test
# ----------------------------------------------------------------------------- #
if __name__ == "__main__":
    key = jax.random.PRNGKey(0)
    k_x, k_r1, k_p, k_r2 = jax.random.split(key, 4)

    ndim = 32            # hidden size D (packed 4-per-row to a 128-wide lane dim)
    n_rows = 64          # small batch of vectors
    n_pairs = math.comb(ndim, 2)

    x = jax.random.normal(k_x, (n_rows, ndim), dtype=jnp.float32)
    rots1 = jax.random.normal(k_r1, (n_pairs,), dtype=jnp.float32)
    phases = jax.random.normal(k_p, (ndim,), dtype=jnp.float32)
    rots2 = jax.random.normal(k_r2, (n_pairs,), dtype=jnp.float32)

    out = qlayer_forward(x, rots1, phases, rots2)
    out = jax.block_until_ready(out)

    # ---- pure-JAX reference mirroring the PyTorch module (complex path) ---- #
    r1c = _plane_rotation_matrix(ndim, rots1).astype(jnp.complex64)
    r2c = _plane_rotation_matrix(ndim, rots2).astype(jnp.complex64)
    pmat = jnp.diag(jnp.exp(1j * phases.astype(jnp.complex64)))
    m = r1c @ pmat @ r2c
    norm = jnp.sqrt(jnp.sum(x.astype(jnp.float32) ** 2, axis=1, keepdims=True))
    y = (x / norm).astype(jnp.complex64) @ m
    ref = (jnp.abs(y) ** 2).astype(jnp.complex64)

    assert out.shape == ref.shape and out.dtype == jnp.complex64
    assert jnp.allclose(out.real, ref.real, atol=1e-4, rtol=1e-4), "qlayer mismatch"
    assert float(jnp.max(jnp.abs(out.imag))) == 0.0

    # ---- also verify the standalone vector_norm kernel ---- #
    vn = jax.block_until_ready(vector_norm(x))
    assert jnp.allclose(vn, x / norm, atol=1e-5, rtol=1e-5), "vector_norm mismatch"

    print("KERNEL_OK")
</pallas_src>

<mosaic_0001>
module attributes {stable_mosaic.version = 11 : i64} {
  func.func @_qlayer_fused_kernel(%arg0: i32, %arg1: memref<8x128xf32, #tpu.memory_space<vmem>>, %arg2: memref<128x128xf32, #tpu.memory_space<vmem>>, %arg3: memref<128x256xf32, #tpu.memory_space<vmem>>, %arg4: memref<256x128xf32, #tpu.memory_space<vmem>>, %arg5: memref<8x128xf32, #tpu.memory_space<vmem>>) attributes {dimension_semantics = [#tpu.dimension_semantics<parallel>], iteration_bounds = array<i64: 2>, scalar_prefetch = 0 : i64, scratch_operands = 0 : i64, tpu.core_type = #tpu.core_type<tc>, window_params = [{transform_indices = @transform_0, window_bounds = array<i64: 8, 128>}, {pipeline_mode = #tpu.pipeline_mode<synchronous>, transform_indices = @transform_1, window_bounds = array<i64: 128, 128>}, {pipeline_mode = #tpu.pipeline_mode<synchronous>, transform_indices = @transform_2, window_bounds = array<i64: 128, 256>}, {pipeline_mode = #tpu.pipeline_mode<synchronous>, transform_indices = @transform_3, window_bounds = array<i64: 256, 128>}, {transform_indices = @transform_4, window_bounds = array<i64: 8, 128>}]} {
    %c0 = arith.constant 0 : index
    %c0_0 = arith.constant 0 : index
    %0 = vector.load %arg1[%c0, %c0_0] : memref<8x128xf32, #tpu.memory_space<vmem>>, vector<8x128xf32>
    %1 = arith.mulf %0, %0 : vector<8x128xf32>
    %c0_1 = arith.constant 0 : index
    %c0_2 = arith.constant 0 : index
    %2 = vector.load %arg2[%c0_1, %c0_2] : memref<128x128xf32, #tpu.memory_space<vmem>>, vector<128x128xf32>
    %cst = arith.constant dense<0.000000e+00> : vector<8x128xf32>
    %3 = tpu.matmul %1, %2, %cst {dimension_numbers = #tpu.dot_dimension_numbers<[1], [0], [0], [1], [0, 0, 1, 1], [], []>} : vector<8x128xf32>, vector<128x128xf32>, vector<8x128xf32> -> vector<8x128xf32>
    %4 = math.rsqrt %3 : vector<8x128xf32>
    %5 = arith.mulf %0, %4 : vector<8x128xf32>
    %c0_3 = arith.constant 0 : index
    %c0_4 = arith.constant 0 : index
    %6 = vector.load %arg3[%c0_3, %c0_4] : memref<128x256xf32, #tpu.memory_space<vmem>>, vector<128x256xf32>
    %cst_5 = arith.constant dense<0.000000e+00> : vector<8x256xf32>
    %7 = tpu.matmul %5, %6, %cst_5 {dimension_numbers = #tpu.dot_dimension_numbers<[1], [0], [0], [1], [0, 0, 1, 1], [], []>} : vector<8x128xf32>, vector<128x256xf32>, vector<8x256xf32> -> vector<8x256xf32>
    %8 = arith.mulf %7, %7 : vector<8x256xf32>
    %c0_6 = arith.constant 0 : index
    %c0_7 = arith.constant 0 : index
    %9 = vector.load %arg4[%c0_6, %c0_7] : memref<256x128xf32, #tpu.memory_space<vmem>>, vector<256x128xf32>
    %cst_8 = arith.constant dense<0.000000e+00> : vector<8x128xf32>
    %10 = tpu.matmul %8, %9, %cst_8 {dimension_numbers = #tpu.dot_dimension_numbers<[1], [0], [0], [1], [0, 0, 1, 1], [], []>} : vector<8x256xf32>, vector<256x128xf32>, vector<8x128xf32> -> vector<8x128xf32>
    %c0_9 = arith.constant 0 : index
    %c0_10 = arith.constant 0 : index
    %11 = vector.load %arg5[%c0_9, %c0_10] : memref<8x128xf32, #tpu.memory_space<vmem>>, vector<8x128xf32>
    tpu.vector_store %arg5[%c0_9, %c0_10], %10 {strides = array<i32>} : memref<8x128xf32, #tpu.memory_space<vmem>>, vector<8x128xf32>,
    return
  }
  func.func @transform_0(%arg0: i32) -> (i32, i32) {
    %c0_i32 = arith.constant 0 : i32
    %c0_i32_0 = arith.constant 0 : i32
    return %arg0, %c0_i32 : i32, i32
  }
  func.func @transform_1(%arg0: i32) -> (i32, i32) {
    %c0_i32 = arith.constant 0 : i32
    %c0_i32_0 = arith.constant 0 : i32
    %c0_i32_1 = arith.constant 0 : i32
    return %c0_i32, %c0_i32_0 : i32, i32
  }
  func.func @transform_2(%arg0: i32) -> (i32, i32) {
    %c0_i32 = arith.constant 0 : i32
    %c0_i32_0 = arith.constant 0 : i32
    %c0_i32_1 = arith.constant 0 : i32
    return %c0_i32, %c0_i32_0 : i32, i32
  }
  func.func @transform_3(%arg0: i32) -> (i32, i32) {
    %c0_i32 = arith.constant 0 : i32
    %c0_i32_0 = arith.constant 0 : i32
    %c0_i32_1 = arith.constant 0 : i32
    return %c0_i32, %c0_i32_0 : i32, i32
  }
  func.func @transform_4(%arg0: i32) -> (i32, i32) {
    %c0_i32 = arith.constant 0 : i32
    %c0_i32_0 = arith.constant 0 : i32
    return %arg0, %c0_i32 : i32, i32
  }
}

</mosaic_0001>

<llo_original>
// kernel: tpu_custom_call.1
$region0: #{tpu_custom_call.1}
  #allocation0 [shape = 'u32[]', space=smem, size = 0x4, offset = 0x4, fixed_abs, tag = 'smem constant byte address 0x4 - core index']
  #allocation1 [shape = 'u32[144,128]{1,0:T(1,128)}', space=vmem, size = 0x12000, scoped, tag = 'internal scratch']
  %s0 = inlined_call_operand.hbm [shape: f32[16,128], index: 0, kind: input, shape index: {}]
  %s1 = inlined_call_operand.hbm [shape: f32[128,128], index: 1, kind: input, shape index: {}]
  %s2 = inlined_call_operand.hbm [shape: f32[128,256], index: 2, kind: input, shape index: {}]
  %s3 = inlined_call_operand.hbm [shape: f32[256,128], index: 3, kind: input, shape index: {}]
  %s4 = inlined_call_operand.hbm [shape: f32[16,128], index: 4, kind: output, shape index: {}]
  %s5 = sld [smem:[#allocation0]]
  $region65: #{tpu_custom_call.1} parent=0
    _
  %s7 = ssub.s32 1, %s5
  %s8 = scalar_select 0, %s7, %s5
  $region1: #{tpu_custom_call.1} parent=0
    #allocation2 [shape = 'u8[8192]{0}', space=vmem, size = 0x2000, scoped, tag = 'input window, operand 0']
    #allocation3 [shape = 's32[2]{0}', space=sflag, size = 0x8, scoped, tag = 'scoped memory for tpu_custom_call.1']
    #allocation4 [shape = 's32[2]{0}', space=sflag, size = 0x8, scoped, tag = 'scoped memory for tpu_custom_call.1']
    #allocation5 [shape = 'u8[65536]{0}', space=vmem, size = 0x10000, scoped, tag = 'input window, operand 1, single buffered']
    #allocation6 [shape = 's32[1]{0}', space=sflag, size = 0x4, scoped, tag = 'scoped memory for tpu_custom_call.1']
    #allocation7 [shape = 'u8[131072]{0}', space=vmem, size = 0x20000, scoped, tag = 'input window, operand 2, single buffered']
    #allocation8 [shape = 'u8[131072]{0}', space=vmem, size = 0x20000, scoped, tag = 'input window, operand 3, single buffered']
    #allocation9 [shape = 's32[1]{0}', space=sflag, size = 0x4, scoped, tag = 'scoped memory for tpu_custom_call.1']
    #allocation10 [shape = 'u8[8192]{0}', space=vmem, size = 0x2000, scoped, tag = 'output window, operand 0']
    %9 = vsyncpa [#allocation3], 0
    %s10 = scalar_lea.sflag [#allocation3], 1
    %11 = vsyncpa %s10, 0
    %12 = vsyncpa [#allocation6], 0
    %13 = vsyncpa [#allocation9], 0
    %14 = vsyncpa [#allocation4], 0
    %s15 = scalar_lea.sflag [#allocation4], 1
    %16 = vsyncpa %s15, 0
    loop: start=0, step=1, limit=4
    $region2: #{tpu_custom_call.1} parent=1 // loop_pre_header
      _
    $region3: #{tpu_custom_call.1} parent=1 // loop_header
      %s18 = sphi 0, %s22
      %p19 = scmp.ge.s32.totalorder %s18, 4
      %s28 = sphi 0, %s30
      %s31 = sphi 0, %s28
      %s32 = sphi 0, %s31
      %s48 = sphi 0, %s32
      %s52 = sphi 0, %s52
      %s54 = sphi 0, %s52
      %s55 = sphi 0, %s54
      %s69 = sphi 0, %s55
      %s73 = sphi 0, %s73
      %s75 = sphi 0, %s73
      %s76 = sphi 0, %s75
      %s90 = sphi 0, %s76
      %s94 = sphi 0, %s94
      %s96 = sphi 0, %s94
      %s97 = sphi 0, %s96
      %s111 = sphi 0, %s97
      %s117 = sphi 0, %s119
      %s120 = sphi 0, %s117
      %s121 = sphi 0, %s120
      %s137 = sphi 0, %s121
    $region4: #{tpu_custom_call.1} parent=1 // loop_header_branch
      %21 = sbr.rel (%p19) target = $region8
    $region5: #{tpu_custom_call.1} parent=1 // loop_body
      %s23 = ssub.s32 %s18, 1
      %s24 = ssub.s32 %s18, 2
      %s25 = sadd.s32 %s18, 1
      %s26 = ssub.s32 %s18, %s25
      %p27 = scmp.eq.s32.totalorder %s26, 0
      %s29 = sadd.s32 %s28, 1
      %s30 = scalar_select %p27, %s28, %s29
      %p33 = pneg %p27
      %p34 = scmp.eq.s32.totalorder %s18, 1
      %p35 = por %p33, %p34
      %p36 = scmp.ne.s32.totalorder %s28, %s31
      %p37 = scmp.eq.s32.totalorder %s18, 0
      %p38 = por %p36, %p37
      %p39 = scmp.ne.s32.totalorder %s28, %s31
      %p40 = scmp.eq.s32.totalorder %s23, 1
      %p41 = por %p39, %p40
      %p42 = scmp.ne.s32.totalorder %s31, %s32
      %p43 = scmp.eq.s32.totalorder %s23, 0
      %p44 = por %p42, %p43
      %p45 = scmp.ne.s32.totalorder %s31, %s32
      %p46 = scmp.eq.s32.totalorder %s24, 1
      %p47 = por %p45, %p46
      %p49 = scmp.ne.s32.totalorder %s32, %s48
      %p50 = scmp.eq.s32.totalorder %s24, 0
      %p51 = por %p49, %p50
      %s53 = sadd.s32 %s52, 1
      %p56 = scmp.eq.s32.totalorder %s18, 1
      %p57 = scmp.ne.s32.totalorder %s52, %s54
      %p58 = scmp.eq.s32.totalorder %s18, 0
      %p59 = por %p57, %p58
      %p60 = scmp.ne.s32.totalorder %s52, %s54
      %p61 = scmp.eq.s32.totalorder %s23, 1
      %p62 = por %p60, %p61
      %p63 = scmp.ne.s32.totalorder %s54, %s55
      %p64 = scmp.eq.s32.totalorder %s23, 0
      %p65 = por %p63, %p64
      %p66 = scmp.ne.s32.totalorder %s54, %s55
      %p67 = scmp.eq.s32.totalorder %s24, 1
      %p68 = por %p66, %p67
      %p70 = scmp.ne.s32.totalorder %s55, %s69
      %p71 = scmp.eq.s32.totalorder %s24, 0
      %p72 = por %p70, %p71
      %s74 = sadd.s32 %s73, 1
      %p77 = scmp.eq.s32.totalorder %s18, 1
      %p78 = scmp.ne.s32.totalorder %s73, %s75
      %p79 = scmp.eq.s32.totalorder %s18, 0
      %p80 = por %p78, %p79
      %p81 = scmp.ne.s32.totalorder %s73, %s75
      %p82 = scmp.eq.s32.totalorder %s23, 1
      %p83 = por %p81, %p82
      %p84 = scmp.ne.s32.totalorder %s75, %s76
      %p85 = scmp.eq.s32.totalorder %s23, 0
      %p86 = por %p84, %p85
      %p87 = scmp.ne.s32.totalorder %s75, %s76
      %p88 = scmp.eq.s32.totalorder %s24, 1
      %p89 = por %p87, %p88
      %p91 = scmp.ne.s32.totalorder %s76, %s90
      %p92 = scmp.eq.s32.totalorder %s24, 0
      %p93 = por %p91, %p92
      %s95 = sadd.s32 %s94, 1
      %p98 = scmp.eq.s32.totalorder %s18, 1
      %p99 = scmp.ne.s32.totalorder %s94, %s96
      %p100 = scmp.eq.s32.totalorder %s18, 0
      %p101 = por %p99, %p100
      %p102 = scmp.ne.s32.totalorder %s94, %s96
      %p103 = scmp.eq.s32.totalorder %s23, 1
      %p104 = por %p102, %p103
      %p105 = scmp.ne.s32.totalorder %s96, %s97
      %p106 = scmp.eq.s32.totalorder %s23, 0
      %p107 = por %p105, %p106
      %p108 = scmp.ne.s32.totalorder %s96, %s97
      %p109 = scmp.eq.s32.totalorder %s24, 1
      %p110 = por %p108, %p109
      %p112 = scmp.ne.s32.totalorder %s97, %s111
      %p113 = scmp.eq.s32.totalorder %s24, 0
      %p114 = por %p112, %p113
      %s115 = ssub.s32 %s18, %s25
      %p116 = scmp.eq.s32.totalorder %s115, 0
      %s118 = sadd.s32 %s117, 1
      %s119 = scalar_select %p116, %s117, %s118
      %p122 = pneg %p116
      %p123 = scmp.eq.s32.totalorder %s18, 1
      %p124 = por %p122, %p123
      %p125 = scmp.ne.s32.totalorder %s117, %s120
      %p126 = scmp.eq.s32.totalorder %s18, 0
      %p127 = por %p125, %p126
      %p128 = scmp.ne.s32.totalorder %s117, %s120
      %p129 = scmp.eq.s32.totalorder %s23, 1
      %p130 = por %p128, %p129
      %p131 = scmp.ne.s32.totalorder %s120, %s121
      %p132 = scmp.eq.s32.totalorder %s23, 0
      %p133 = por %p131, %p132
      %p134 = scmp.ne.s32.totalorder %s120, %s121
      %p135 = scmp.eq.s32.totalorder %s24, 1
      %p136 = por %p134, %p135
      %p138 = scmp.ne.s32.totalorder %s121, %s137
      %p139 = scmp.eq.s32.totalorder %s24, 0
      %p140 = por %p138, %p139
      %p141 = scmp.le.s32.totalorder 1, %s18
      %p142 = scmp.lt.s32.totalorder %s18, 3
      %p143 = pnand %p141, %p142
      %p144 = pneg %p143
      // Predicated region
      $region9: #{tpu_custom_call.1} parent=5 // pred_check
        _
      $region10: #{tpu_custom_call.1} parent=5 // pred_check_branch
        %146 = sbr.rel (%p143) target = $region12
      $region11: #{tpu_custom_call.1} parent=5 // pred_region
        %s147 = ssub.s32 %s18, 1
        // Predicated region
        $region13: #{tpu_custom_call.1} parent=11 // pred_check
          %p148 = pneg %p65
        $region14: #{tpu_custom_call.1} parent=11 // pred_check_branch
          %150 = sbr.rel (%p148) target = $region16
        $region15: #{tpu_custom_call.1} parent=11 // pred_region
          %s152 = ssub.s32 2048, 2048
          %153 = vsyncadd [#allocation6], %s152
          %s154 = sshll.u32 [#allocation5], 4
          %s155 = int_to_ptr.vmem [resolvable:$true] %s154
          %160 = dma.hbm_to_vmem [thread:$0]  %s1, 2048, %s155, [#allocation6], 128, 128, 8
        $region16: #{tpu_custom_call.1} parent=11 // pred_fallthru
          _
        // Predicated region
        $region17: #{tpu_custom_call.1} parent=11 // pred_check
          %p161 = pneg %p86
        $region18: #{tpu_custom_call.1} parent=11 // pred_check_branch
          %163 = sbr.rel (%p161) target = $region20
        $region19: #{tpu_custom_call.1} parent=11 // pred_region
          %s165 = ssub.s32 4096, 4096
          %166 = vsyncadd [#allocation6], %s165
          %s167 = sshll.u32 [#allocation7], 4
          %s168 = int_to_ptr.vmem [resolvable:$true] %s167
          %173 = dma.hbm_to_vmem [thread:$0]  %s2, 4096, %s168, [#allocation6], 256, 256, 16
        $region20: #{tpu_custom_call.1} parent=11 // pred_fallthru
          _
        // Predicated region
        $region21: #{tpu_custom_call.1} parent=11 // pred_check
          %p174 = pneg %p107
        $region22: #{tpu_custom_call.1} parent=11 // pred_check_branch
          %176 = sbr.rel (%p174) target = $region24
        $region23: #{tpu_custom_call.1} parent=11 // pred_region
          %s178 = ssub.s32 4096, 4096
          %179 = vsyncadd [#allocation9], %s178
          %s180 = sshll.u32 [#allocation8], 4
          %s181 = int_to_ptr.vmem [resolvable:$true] %s180
          %186 = dma.hbm_to_vmem [thread:$0]  %s3, 4096, %s181, [#allocation9], 128, 128, 8
        $region24: #{tpu_custom_call.1} parent=11 // pred_fallthru
          _
      $region12: #{tpu_custom_call.1} parent=5 // pred_fallthru
        _
      %p187 = scmp.lt.s32.totalorder %s18, 2
      // Predicated region
      $region25: #{tpu_custom_call.1} parent=5 // pred_check
        %p188 = pneg %p187
      $region26: #{tpu_custom_call.1} parent=5 // pred_check_branch
        %190 = sbr.rel (%p188) target = $region28
      $region27: #{tpu_custom_call.1} parent=5 // pred_region
        // Predicated region
        $region29: #{tpu_custom_call.1} parent=27 // pred_check
          %p191 = pneg %p38
        $region30: #{tpu_custom_call.1} parent=27 // pred_check_branch
          %193 = sbr.rel (%p191) target = $region32
        $region31: #{tpu_custom_call.1} parent=27 // pred_region
          %s194 = sand.u32 %s28, 1
          %s195 = scalar_lea.sflag [#allocation3], %s194
          %s196 = sand.u32 %s28, 1
          %s197 = smul.addr %s196, 8
          %s198 = scalar_lea.vmem [#allocation2], %s197
          %s200 = ssub.s32 128, 128
          %201 = vsyncadd %s195, %s200
          %s202 = smul.addr %s18, 128
          %s203 = scalar_lea.hbm %s0, %s202
          %s205 = sshll.u32 %s198, 4
          %s206 = int_to_ptr.vmem [resolvable:$true] %s205
          %208 = dma.hbm_to_vmem [thread:$0]  %s203, 128, %s206, %s195
        $region32: #{tpu_custom_call.1} parent=27 // pred_fallthru
          _
      $region28: #{tpu_custom_call.1} parent=5 // pred_fallthru
        _
      %p209 = scmp.le.s32.totalorder 1, %s18
      %p210 = scmp.lt.s32.totalorder %s18, 3
      %p211 = pnand %p209, %p210
      %p212 = pneg %p211
      // Predicated region
      $region33: #{tpu_custom_call.1} parent=5 // pred_check
        _
      $region34: #{tpu_custom_call.1} parent=5 // pred_check_branch
        %214 = sbr.rel (%p211) target = $region36
      $region35: #{tpu_custom_call.1} parent=5 // pred_region
        %s215 = ssub.s32 %s18, 1
        %s216 = sand.u32 %s31, 1
        %s217 = scalar_lea.sflag [#allocation3], %s216
        %s218 = sand.u32 %s31, 1
        %s219 = smul.addr %s218, 8
        %s220 = scalar_lea.vmem [#allocation2], %s219
        // Predicated region
        $region37: #{tpu_custom_call.1} parent=35 // pred_check
          %p221 = pneg %p44
        $region38: #{tpu_custom_call.1} parent=35 // pred_check_branch
          %223 = sbr.rel (%p221) target = $region40
        $region39: #{tpu_custom_call.1} parent=35 // pred_region
          %224 = dma.done %s217, 128
        $region40: #{tpu_custom_call.1} parent=35 // pred_fallthru
          _
        // Predicated region
        $region41: #{tpu_custom_call.1} parent=35 // pred_check
          %p225 = pneg %p65
        $region42: #{tpu_custom_call.1} parent=35 // pred_check_branch
          %227 = sbr.rel (%p225) target = $region44
        $region43: #{tpu_custom_call.1} parent=35 // pred_region
          %228 = dma.done [#allocation6], 2048
        $region44: #{tpu_custom_call.1} parent=35 // pred_fallthru
          _
        // Predicated region
        $region45: #{tpu_custom_call.1} parent=35 // pred_check
          %p229 = pneg %p86
        $region46: #{tpu_custom_call.1} parent=35 // pred_check_branch
          %231 = sbr.rel (%p229) target = $region48
        $region47: #{tpu_custom_call.1} parent=35 // pred_region
          %232 = dma.done [#allocation6], 4096
        $region48: #{tpu_custom_call.1} parent=35 // pred_fallthru
          _
        // Predicated region
        $region49: #{tpu_custom_call.1} parent=35 // pred_check
          %p233 = pneg %p107
        $region50: #{tpu_custom_call.1} parent=35 // pred_check_branch
          %235 = sbr.rel (%p233) target = $region52
        $region51: #{tpu_custom_call.1} parent=35 // pred_region
          %236 = dma.done [#allocation9], 4096
        $region52: #{tpu_custom_call.1} parent=35 // pred_fallthru
          _
        %s237 = sand.u32 %s31, 1
        %s238 = scalar_lea.sflag [#allocation3], %s237
        %s239 = sand.u32 %s31, 1
        %s240 = smul.addr %s239, 8
        %s241 = scalar_lea.vmem [#allocation2], %s240
        %p242 = pneg %p44
        %p243 = pneg %p41
        %p244 = pneg %p65
        %p245 = pneg %p62
        %p246 = pneg %p86
        %p247 = pneg %p83
        %p248 = pneg %p107
        %p249 = pneg %p104
        %p250 = pneg %p133
        %p251 = pneg %p130
        %s252 = sand.u32 %s120, 1
        %s253 = scalar_lea.sflag [#allocation4], %s252
        %s254 = sand.u32 %s120, 1
        %s255 = smul.addr %s254, 8
        %s256 = scalar_lea.vmem [#allocation10], %s255
        %v257 = vld [vmem:[%s220] sm:$0xff]
        %v258 = vmul.f32 %v257, %v257
        %v259 = vld [vmem:[#allocation5] sm:$0xff]
        %v260 = vld [vmem:[#allocation5 + $0x8] sm:$0xff]
        %v261 = vld [vmem:[#allocation5 + $0x10] sm:$0xff]
        %v262 = vld [vmem:[#allocation5 + $0x18] sm:$0xff]
        %v263 = vld [vmem:[#allocation5 + $0x20] sm:$0xff]
        %v264 = vld [vmem:[#allocation5 + $0x28] sm:$0xff]
        %v265 = vld [vmem:[#allocation5 + $0x30] sm:$0xff]
        %v266 = vld [vmem:[#allocation5 + $0x38] sm:$0xff]
        %v267 = vld [vmem:[#allocation5 + $0x40] sm:$0xff]
        %v268 = vld [vmem:[#allocation5 + $0x48] sm:$0xff]
        %v269 = vld [vmem:[#allocation5 + $0x50] sm:$0xff]
        %v270 = vld [vmem:[#allocation5 + $0x58] sm:$0xff]
        %v271 = vld [vmem:[#allocation5 + $0x60] sm:$0xff]
        %v272 = vld [vmem:[#allocation5 + $0x68] sm:$0xff]
        %v273 = vld [vmem:[#allocation5 + $0x70] sm:$0xff]
        %v274 = vld [vmem:[#allocation5 + $0x78] sm:$0xff]
        %275 = vmatprep.subr.mxu0 0.0
        %276 = vmatpush1.msra.mxu0 %v259
        %277 = vmatprep.subr.mxu0 0.0
        %278 = vmatpush1.msra.mxu0 %v260
        %279 = vmatprep.subr.mxu0 0.0
        %280 = vmatpush1.msra.mxu0 %v261
        %281 = vmatprep.subr.mxu0 0.0
        %282 = vmatpush1.msra.mxu0 %v262
        %283 = vmatprep.subr.mxu0 0.0
        %284 = vmatpush1.msra.mxu0 %v263
        %285 = vmatprep.subr.mxu0 0.0
        %286 = vmatpush1.msra.mxu0 %v264
        %287 = vmatprep.subr.mxu0 0.0
        %288 = vmatpush1.msra.mxu0 %v265
        %289 = vmatprep.subr.mxu0 0.0
        %290 = vmatpush1.msra.mxu0 %v266
        %291 = vmatprep.subr.mxu0 0.0
        %292 = vmatpush1.msra.mxu0 %v267
        %293 = vmatprep.subr.mxu0 0.0
        %294 = vmatpush1.msra.mxu0 %v268
        %295 = vmatprep.subr.mxu0 0.0
        %296 = vmatpush1.msra.mxu0 %v269
        %297 = vmatprep.subr.mxu0 0.0
        %298 = vmatpush1.msra.mxu0 %v270
        %299 = vmatprep.subr.mxu0 0.0
        %300 = vmatpush1.msra.mxu0 %v271
        %301 = vmatprep.subr.mxu0 0.0
        %302 = vmatpush1.msra.mxu0 %v272
        %303 = vmatprep.subr.mxu0 0.0
        %304 = vmatpush1.msra.mxu0 %v273
        %305 = vmatprep.subr.mxu0 0.0
        %306 = vmatpush1.msra.mxu0 %v274
        %307 = vmatprep.subr.mxu0 0.0
        %308 = vmatpush1.msra.mxu0 0.0
        %309 = vmatprep.subr.mxu0 0.0
        %310 = vmatpush1.msra.mxu0 0.0
        %311 = vmatprep.subr.mxu0 0.0
        %312 = vmatpush1.msra.mxu0 0.0
        %313 = vmatprep.subr.mxu0 0.0
        %314 = vmatpush1.msra.mxu0 0.0
        %315 = vmatprep.subr.mxu0 0.0
        %316 = vmatpush1.msra.mxu0 0.0
        %317 = vmatprep.subr.mxu0 0.0
        %318 = vmatpush1.msra.mxu0 0.0
        %319 = vmatprep.subr.mxu0 0.0
        %320 = vmatpush1.msra.mxu0 0.0
        %321 = vmatprep.subr.mxu0 0.0
        %322 = vmatpush1.msra.mxu0 0.0
        %323 = vmatprep.subr.mxu0 0.0
        %324 = vmatpush1.msra.mxu0 0.0
        %325 = vmatprep.subr.mxu0 0.0
        %326 = vmatpush1.msra.mxu0 0.0
        %327 = vmatprep.subr.mxu0 0.0
        %328 = vmatpush1.msra.mxu0 0.0
        %329 = vmatprep.subr.mxu0 0.0
        %330 = vmatpush1.msra.mxu0 0.0
        %331 = vmatprep.subr.mxu0 0.0
        %332 = vmatpush1.msra.mxu0 0.0
        %333 = vmatprep.subr.mxu0 0.0
        %334 = vmatpush1.msra.mxu0 0.0
        %335 = vmatprep.subr.mxu0 0.0
        %336 = vmatpush1.msra.mxu0 0.0
        %337 = vmatprep.subr.mxu0 0.0
        %338 = vmatpush1.msra.mxu0 0.0
        %339 = vmatprep.mubr.f32.mxu0 0.0
        %340 = vmatmul.mubr.f32.gmra.mrb[0].mxu0 %v258
        %v341 = vpop.f32.mrb[0].mxu0
        %v342 = vadd.f32 0.0, %v341
        %v343 = vpop.f32.mrb[0].mxu0
        %344 = vdwg.mxu0
        %v345 = vrsqrt.pop %v342
        %v346 = vmul.f32 %v257, %v345
        %v347 = vld [vmem:[#allocation7] sm:$0xff]
        %v348 = vld [vmem:[#allocation7 + $0x8] sm:$0xff]
        %v349 = vld [vmem:[#allocation7 + $0x10] sm:$0xff]
        %v350 = vld [vmem:[#allocation7 + $0x18] sm:$0xff]
        %v351 = vld [vmem:[#allocation7 + $0x20] sm:$0xff]
        %v352 = vld [vmem:[#allocation7 + $0x28] sm:$0xff]
        %v353 = vld [vmem:[#allocation7 + $0x30] sm:$0xff]
        %v354 = vld [vmem:[#allocation7 + $0x38] sm:$0xff]
        %v355 = vld [vmem:[#allocation7 + $0x40] sm:$0xff]
        %v356 = vld [vmem:[#allocation7 + $0x48] sm:$0xff]
        %v357 = vld [vmem:[#allocation7 + $0x50] sm:$0xff]
        %v358 = vld [vmem:[#allocation7 + $0x58] sm:$0xff]
        %v359 = vld [vmem:[#allocation7 + $0x60] sm:$0xff]
        %v360 = vld [vmem:[#allocation7 + $0x68] sm:$0xff]
        %v361 = vld [vmem:[#allocation7 + $0x70] sm:$0xff]
        %v362 = vld [vmem:[#allocation7 + $0x78] sm:$0xff]
        %v363 = vld [vmem:[#allocation7 + $0x80] sm:$0xff]
        %v364 = vld [vmem:[#allocation7 + $0x88] sm:$0xff]
        %v365 = vld [vmem:[#allocation7 + $0x90] sm:$0xff]
        %v366 = vld [vmem:[#allocation7 + $0x98] sm:$0xff]
        %v367 = vld [vmem:[#allocation7 + $0xa0] sm:$0xff]
        %v368 = vld [vmem:[#allocation7 + $0xa8] sm:$0xff]
        %v369 = vld [vmem:[#allocation7 + $0xb0] sm:$0xff]
        %v370 = vld [vmem:[#allocation7 + $0xb8] sm:$0xff]
        %v371 = vld [vmem:[#allocation7 + $0xc0] sm:$0xff]
        %v372 = vld [vmem:[#allocation7 + $0xc8] sm:$0xff]
        %v373 = vld [vmem:[#allocation7 + $0xd0] sm:$0xff]
        %v374 = vld [vmem:[#allocation7 + $0xd8] sm:$0xff]
        %v375 = vld [vmem:[#allocation7 + $0xe0] sm:$0xff]
        %v376 = vld [vmem:[#allocation7 + $0xe8] sm:$0xff]
        %v377 = vld [vmem:[#allocation7 + $0xf0] sm:$0xff]
        %v378 = vld [vmem:[#allocation7 + $0xf8] sm:$0xff]
        %379 = vmatprep.subr.mxu0 %v348
        %380 = vmatpush1.msra.mxu0 %v347
        %381 = vmatprep.subr.mxu0 %v350
        %382 = vmatpush1.msra.mxu0 %v349
        %383 = vmatprep.subr.mxu0 %v352
        %384 = vmatpush1.msra.mxu0 %v351
        %385 = vmatprep.subr.mxu0 %v354
        %386 = vmatpush1.msra.mxu0 %v353
        %387 = vmatprep.subr.mxu0 %v356
        %388 = vmatpush1.msra.mxu0 %v355
        %389 = vmatprep.subr.mxu0 %v358
        %390 = vmatpush1.msra.mxu0 %v357
        %391 = vmatprep.subr.mxu0 %v360
        %392 = vmatpush1.msra.mxu0 %v359
        %393 = vmatprep.subr.mxu0 %v362
        %394 = vmatpush1.msra.mxu0 %v361
        %395 = vmatprep.subr.mxu0 %v364
        %396 = vmatpush1.msra.mxu0 %v363
        %397 = vmatprep.subr.mxu0 %v366
        %398 = vmatpush1.msra.mxu0 %v365
        %399 = vmatprep.subr.mxu0 %v368
        %400 = vmatpush1.msra.mxu0 %v367
        %401 = vmatprep.subr.mxu0 %v370
        %402 = vmatpush1.msra.mxu0 %v369
        %403 = vmatprep.subr.mxu0 %v372
        %404 = vmatpush1.msra.mxu0 %v371
        %405 = vmatprep.subr.mxu0 %v374
        %406 = vmatpush1.msra.mxu0 %v373
        %407 = vmatprep.subr.mxu0 %v376
        %408 = vmatpush1.msra.mxu0 %v375
        %409 = vmatprep.subr.mxu0 %v378
        %410 = vmatpush1.msra.mxu0 %v377
        %411 = vmatprep.subr.mxu0 0.0
        %412 = vmatpush1.msra.mxu0 0.0
        %413 = vmatprep.subr.mxu0 0.0
        %414 = vmatpush1.msra.mxu0 0.0
        %415 = vmatprep.subr.mxu0 0.0
        %416 = vmatpush1.msra.mxu0 0.0
        %417 = vmatprep.subr.mxu0 0.0
        %418 = vmatpush1.msra.mxu0 0.0
        %419 = vmatprep.subr.mxu0 0.0
        %420 = vmatpush1.msra.mxu0 0.0
        %421 = vmatprep.subr.mxu0 0.0
        %422 = vmatpush1.msra.mxu0 0.0
        %423 = vmatprep.subr.mxu0 0.0
        %424 = vmatpush1.msra.mxu0 0.0
        %425 = vmatprep.subr.mxu0 0.0
        %426 = vmatpush1.msra.mxu0 0.0
        %427 = vmatprep.subr.mxu0 0.0
        %428 = vmatpush1.msra.mxu0 0.0
        %429 = vmatprep.subr.mxu0 0.0
        %430 = vmatpush1.msra.mxu0 0.0
        %431 = vmatprep.subr.mxu0 0.0
        %432 = vmatpush1.msra.mxu0 0.0
        %433 = vmatprep.subr.mxu0 0.0
        %434 = vmatpush1.msra.mxu0 0.0
        %435 = vmatprep.subr.mxu0 0.0
        %436 = vmatpush1.msra.mxu0 0.0
        %437 = vmatprep.subr.mxu0 0.0
        %438 = vmatpush1.msra.mxu0 0.0
        %439 = vmatprep.subr.mxu0 0.0
        %440 = vmatpush1.msra.mxu0 0.0
        %441 = vmatprep.subr.mxu0 0.0
        %442 = vmatpush1.msra.mxu0 0.0
        %443 = vmatprep.mubr.f32.mxu0 0.0
        %444 = vmatmul.mubr.f32.gmra.mrb[0].mxu0 %v346
        %v445 = vpop.f32.mrb[0].mxu0
        %v446 = vadd.f32 0.0, %v445
        %v447 = vpop.f32.mrb[0].mxu0
        %v448 = vadd.f32 0.0, %v447
        %449 = vdwg.mxu0
        %v450 = vmul.f32 %v446, %v446
        %v451 = vmul.f32 %v448, %v448
        %v452 = vld [vmem:[#allocation8] sm:$0xff]
        %v453 = vld [vmem:[#allocation8 + $0x8] sm:$0xff]
        %v454 = vld [vmem:[#allocation8 + $0x10] sm:$0xff]
        %v455 = vld [vmem:[#allocation8 + $0x18] sm:$0xff]
        %v456 = vld [vmem:[#allocation8 + $0x20] sm:$0xff]
        %v457 = vld [vmem:[#allocation8 + $0x28] sm:$0xff]
        %v458 = vld [vmem:[#allocation8 + $0x30] sm:$0xff]
        %v459 = vld [vmem:[#allocation8 + $0x38] sm:$0xff]
        %v460 = vld [vmem:[#allocation8 + $0x40] sm:$0xff]
        %v461 = vld [vmem:[#allocation8 + $0x48] sm:$0xff]
        %v462 = vld [vmem:[#allocation8 + $0x50] sm:$0xff]
        %v463 = vld [vmem:[#allocation8 + $0x58] sm:$0xff]
        %v464 = vld [vmem:[#allocation8 + $0x60] sm:$0xff]
        %v465 = vld [vmem:[#allocation8 + $0x68] sm:$0xff]
        %v466 = vld [vmem:[#allocation8 + $0x70] sm:$0xff]
        %v467 = vld [vmem:[#allocation8 + $0x78] sm:$0xff]
        %v468 = vld [vmem:[#allocation8 + $0x80] sm:$0xff]
        %v469 = vld [vmem:[#allocation8 + $0x88] sm:$0xff]
        %v470 = vld [vmem:[#allocation8 + $0x90] sm:$0xff]
        %v471 = vld [vmem:[#allocation8 + $0x98] sm:$0xff]
        %v472 = vld [vmem:[#allocation8 + $0xa0] sm:$0xff]
        %v473 = vld [vmem:[#allocation8 + $0xa8] sm:$0xff]
        %v474 = vld [vmem:[#allocation8 + $0xb0] sm:$0xff]
        %v475 = vld [vmem:[#allocation8 + $0xb8] sm:$0xff]
        %v476 = vld [vmem:[#allocation8 + $0xc0] sm:$0xff]
        %v477 = vld [vmem:[#allocation8 + $0xc8] sm:$0xff]
        %v478 = vld [vmem:[#allocation8 + $0xd0] sm:$0xff]
        %v479 = vld [vmem:[#allocation8 + $0xd8] sm:$0xff]
        %v480 = vld [vmem:[#allocation8 + $0xe0] sm:$0xff]
        %v481 = vld [vmem:[#allocation8 + $0xe8] sm:$0xff]
        %v482 = vld [vmem:[#allocation8 + $0xf0] sm:$0xff]
        %v483 = vld [vmem:[#allocation8 + $0xf8] sm:$0xff]
        %484 = vmatprep.subr.mxu0 0.0
        %485 = vmatpush1.msra.mxu0 %v452
        %486 = vmatprep.subr.mxu0 0.0
        %487 = vmatpush1.msra.mxu0 %v453
        %488 = vmatprep.subr.mxu0 0.0
        %489 = vmatpush1.msra.mxu0 %v454
        %490 = vmatprep.subr.mxu0 0.0
        %491 = vmatpush1.msra.mxu0 %v455
        %492 = vmatprep.subr.mxu0 0.0
        %493 = vmatpush1.msra.mxu0 %v456
        %494 = vmatprep.subr.mxu0 0.0
        %495 = vmatpush1.msra.mxu0 %v457
        %496 = vmatprep.subr.mxu0 0.0
        %497 = vmatpush1.msra.mxu0 %v458
        %498 = vmatprep.subr.mxu0 0.0
        %499 = vmatpush1.msra.mxu0 %v459
        %500 = vmatprep.subr.mxu0 0.0
        %501 = vmatpush1.msra.mxu0 %v460
        %502 = vmatprep.subr.mxu0 0.0
        %503 = vmatpush1.msra.mxu0 %v461
        %504 = vmatprep.subr.mxu0 0.0
        %505 = vmatpush1.msra.mxu0 %v462
        %506 = vmatprep.subr.mxu0 0.0
        %507 = vmatpush1.msra.mxu0 %v463
        %508 = vmatprep.subr.mxu0 0.0
        %509 = vmatpush1.msra.mxu0 %v464
        %510 = vmatprep.subr.mxu0 0.0
        %511 = vmatpush1.msra.mxu0 %v465
        %512 = vmatprep.subr.mxu0 0.0
        %513 = vmatpush1.msra.mxu0 %v466
        %514 = vmatprep.subr.mxu0 0.0
        %515 = vmatpush1.msra.mxu0 %v467
        %516 = vmatprep.subr.mxu0 0.0
        %517 = vmatpush1.msra.mxu0 %v468
        %518 = vmatprep.subr.mxu0 0.0
        %519 = vmatpush1.msra.mxu0 %v469
        %520 = vmatprep.subr.mxu0 0.0
        %521 = vmatpush1.msra.mxu0 %v470
        %522 = vmatprep.subr.mxu0 0.0
        %523 = vmatpush1.msra.mxu0 %v471
        %524 = vmatprep.subr.mxu0 0.0
        %525 = vmatpush1.msra.mxu0 %v472
        %526 = vmatprep.subr.mxu0 0.0
        %527 = vmatpush1.msra.mxu0 %v473
        %528 = vmatprep.subr.mxu0 0.0
        %529 = vmatpush1.msra.mxu0 %v474
        %530 = vmatprep.subr.mxu0 0.0
        %531 = vmatpush1.msra.mxu0 %v475
        %532 = vmatprep.subr.mxu0 0.0
        %533 = vmatpush1.msra.mxu0 %v476
        %534 = vmatprep.subr.mxu0 0.0
        %535 = vmatpush1.msra.mxu0 %v477
        %536 = vmatprep.subr.mxu0 0.0
        %537 = vmatpush1.msra.mxu0 %v478
        %538 = vmatprep.subr.mxu0 0.0
        %539 = vmatpush1.msra.mxu0 %v479
        %540 = vmatprep.subr.mxu0 0.0
        %541 = vmatpush1.msra.mxu0 %v480
        %542 = vmatprep.subr.mxu0 0.0
        %543 = vmatpush1.msra.mxu0 %v481
        %544 = vmatprep.subr.mxu0 0.0
        %545 = vmatpush1.msra.mxu0 %v482
        %546 = vmatprep.subr.mxu0 0.0
        %547 = vmatpush1.msra.mxu0 %v483
        %548 = vmatprep.mubr.f32.mxu0 %v451
        %549 = vmatmul.mubr.f32.gmra.mrb[0].mxu0 %v450
        %v550 = vpop.f32.mrb[0].mxu0
        %v551 = vadd.f32 0.0, %v550
        %v552 = vpop.f32.mrb[0].mxu0
        %553 = vdwg.mxu0
        %554 = vst [vmem:[%s256] sm:$0xff] %v551
        %s555 = sand.u32 %s120, 1
        %s556 = scalar_lea.sflag [#allocation4], %s555
        %s557 = sand.u32 %s120, 1
        %s558 = smul.addr %s557, 8
        %s559 = scalar_lea.vmem [#allocation10], %s558
        // Predicated region
        $region53: #{tpu_custom_call.1} parent=35 // pred_check
          %p560 = pneg %p130
        $region54: #{tpu_custom_call.1} parent=35 // pred_check_branch
          %562 = sbr.rel (%p560) target = $region56
        $region55: #{tpu_custom_call.1} parent=35 // pred_region
          %s564 = ssub.s32 128, 128
          %565 = vsyncadd %s556, %s564
          %s566 = smul.addr %s23, 128
          %s567 = scalar_lea.hbm %s4, %s566
          %s569 = sshll.u32 %s559, 4
          %s570 = int_to_ptr.vmem [resolvable:$true] %s569
          %572 = dma.vmem_to_hbm [thread:$0]  %s570, 128, %s567, %s556
        $region56: #{tpu_custom_call.1} parent=35 // pred_fallthru
          _
      $region36: #{tpu_custom_call.1} parent=5 // pred_fallthru
        _
      %p573 = scmp.le.s32.totalorder 2, %s18
      // Predicated region
      $region57: #{tpu_custom_call.1} parent=5 // pred_check
        %p574 = pneg %p573
      $region58: #{tpu_custom_call.1} parent=5 // pred_check_branch
        %576 = sbr.rel (%p574) target = $region60
      $region59: #{tpu_custom_call.1} parent=5 // pred_region
        %s577 = ssub.s32 %s18, 2
        // Predicated region
        $region61: #{tpu_custom_call.1} parent=59 // pred_check
          %p578 = pneg %p136
        $region62: #{tpu_custom_call.1} parent=59 // pred_check_branch
          %580 = sbr.rel (%p578) target = $region64
        $region63: #{tpu_custom_call.1} parent=59 // pred_region
          %s581 = sand.u32 %s121, 1
          %s582 = scalar_lea.sflag [#allocation4], %s581
          %s583 = sand.u32 %s121, 1
          %s584 = smul.addr %s583, 8
          %s585 = scalar_lea.vmem [#allocation10], %s584
          %586 = dma.done %s582, 128
        $region64: #{tpu_custom_call.1} parent=59 // pred_fallthru
          _
      $region60: #{tpu_custom_call.1} parent=5 // pred_fallthru
        _
    $region6: #{tpu_custom_call.1} parent=1 // loop_footer
      %s22 = sadd.s32 1, %s18
    $region7: #{tpu_custom_call.1} parent=1 // loop_footer_branch
      %17 = sbr.rel target = $region3
    $region8: #{tpu_custom_call.1} parent=1 // loop_exit
      _
    %587 = vsyncpa [#allocation3], 1
    %s588 = scalar_lea.sflag [#allocation3], 1
    %589 = vsyncpa %s588, 1
    %590 = vsyncpa [#allocation6], 1
    %591 = vsyncpa [#allocation9], 1
    %592 = vsyncpa [#allocation4], 1
    %s593 = scalar_lea.sflag [#allocation4], 1
    %594 = vsyncpa %s593, 1

</llo_original>
